<compile_context>
chip_gen: v7x
topology: tpu7x:2x2x1
jax: 0.10.0
libtpu: 0.0.40
codegen_flags: <defaults>
</compile_context>

<pallas_src>
import math

import jax
import jax.numpy as jnp
from jax import lax
from jax.experimental import pallas as pl
from jax.experimental.pallas import tpu as pltpu


def _round_up(n, m):
    return ((n + m - 1) // m) * m


def _vmem_cap_bytes():
    try:
        info = pltpu.get_tpu_info()
        cap = getattr(info, "vmem_capacity_bytes", None)
        if cap:
            return int(cap)
    except Exception:
        pass
    return 64 << 20  # conservative default: v7x per-TensorCore VMEM


def _choose_tb(B, Dp, block_b=None):
    # Small D is mem-bound: bigger tiles amortize the ~0.35us/step overhead.
    cap = block_b if block_b is not None else (1024 if Dp <= 512 else 256)
    tb = min(_round_up(cap, 16), _round_up(B, 16))
    if B >= 32:
        # Ensure >= 2 grid steps so v7x's second TensorCore gets work
        # (the batch axis is marked "parallel").
        tb = min(tb, _round_up(-(-B // 2), 16))
    return max(tb, 16)


def _proposal_normal_kernel(x_ref, w1_ref, b1_ref, w2_ref, b2_ref, pr_ref,
                            out_ref):
    # Cast x to the MXU compute dtype in-kernel (saves a wrapper HBM pass).
    x = x_ref[...].astype(w1_ref.dtype)                      # (TB, Dp)

    # lin1 + relu: MXU matmul with f32 accumulate, elementwise in f32.
    h = jnp.dot(x, w1_ref[...], preferred_element_type=jnp.float32)
    h = jnp.maximum(h + b1_ref[...], 0.0)                    # (TB, Dp) f32

    # lin2: output width NP (8 for small D, 128 lane-dense for large D).
    y = jnp.dot(h.astype(w2_ref.dtype), w2_ref[...],
                preferred_element_type=jnp.float32)
    y = y + b2_ref[...]                                      # (TB, NP) f32

    pr = pr_ref[...]                                         # (TB, 2) f32
    pm = pr[:, 0:1]                                          # prior means
    ps = pr[:, 1:2]                                          # prior stds

    # Whole-tile numerically-stable softplus (EUP) + lane-index select:
    # col 0 -> raw mean, col 1 -> softplus(raw std), padded cols stay 0.
    col = lax.broadcasted_iota(jnp.int32, y.shape, 1)
    sp = jnp.maximum(y, 0.0) + jnp.log1p(jnp.exp(-jnp.abs(y)))
    t = jnp.where(col == 1, sp, y)
    out = t * ps + jnp.where(col == 0, pm, 0.0)
    out_ref[...] = out.astype(out_ref.dtype)


def _build_in_specs(TB, Dp, NP, single_buffer_weights):
    def resident(shape):
        idx = lambda i, _n=len(shape): (0,) * _n
        if single_buffer_weights:
            try:
                # Constant index_map => block never changes; one buffer halves
                # the resident-weight VMEM footprint (biggest win on v7x).
                return pl.BlockSpec(shape, idx, pipeline_mode=pl.Buffered(1))
            except (TypeError, AttributeError):
                pass
        return pl.BlockSpec(shape, idx)

    return [
        pl.BlockSpec((TB, Dp), lambda i: (i, 0)),   # x      (streams)
        resident((Dp, Dp)),                          # W1     (resident)
        resident((1, Dp)),                           # b1     (resident)
        resident((Dp, NP)),                          # W2     (resident)
        resident((1, NP)),                           # b2     (resident)
        pl.BlockSpec((TB, 2), lambda i: (i, 0)),     # priors [pm, ps]
    ]


def prep_params(w1, b1, w2, b2, *, compute_dtype=jnp.bfloat16):
    """One-time layout prep: pad to TPU tile granularity and cast the matmul
    weights to the MXU compute dtype.  Do this at init, not per forward."""
    D = w1.shape[0]
    assert w1.shape == (D, D) and b1.shape == (D,)
    assert w2.shape == (D, 2) and b2.shape == (2,)
    Dp = _round_up(max(D, 128), 128)
    # Small-D regime is output-writeback bound: use the minimal legal output
    # width. Large D: keep 128 lanes so the store stays unmasked/lane-dense.
    NP = 8 if Dp <= 512 else 128
    w1p = jnp.zeros((Dp, Dp), compute_dtype).at[:D, :D].set(
        w1.astype(compute_dtype))
    b1p = jnp.zeros((1, Dp), jnp.float32).at[0, :D].set(b1.astype(jnp.float32))
    w2p = jnp.zeros((Dp, NP), compute_dtype).at[:D, :2].set(
        w2.astype(compute_dtype))
    b2p = jnp.zeros((1, NP), jnp.float32).at[0, :2].set(b2.astype(jnp.float32))
    return {"w1": w1p, "b1": b1p, "w2": w2p, "b2": b2p,
            "D": D, "Dp": Dp, "NP": NP, "compute_dtype": compute_dtype}


def proposal_normal_forward(x, params, prior_means, prior_stds, *,
                            block_b=None):
    """x: (B, D) float32; params: output of prep_params (weights already
    padded/cast, w1/w2 pre-transposed so the kernel computes x @ W);
    prior_means/prior_stds: (B,).  Returns (True, (B, 2) float32)."""
    B, D = x.shape
    assert D == params["D"]
    Dp, NP = params["Dp"], params["NP"]
    w1p, b1p, w2p, b2p = params["w1"], params["b1"], params["w2"], params["b2"]

    TB = _choose_tb(B, Dp, block_b)
    Bp = _round_up(B, TB)

    # Avoid a wrapper pad pass over x when it is already tile-aligned; the
    # bf16 cast happens in-kernel either way.
    if B == Bp and D == Dp:
        xp = x
    else:
        xp = jnp.zeros((Bp, Dp), x.dtype).at[:B, :D].set(x)

    prior = jnp.zeros((Bp, 2), jnp.float32)
    prior = prior.at[:B, 0].set(prior_means.astype(jnp.float32))
    prior = prior.at[:B, 1].set(prior_stds.astype(jnp.float32))

    # --- VMEM budget: single-buffered resident weights + double-buffered
    # streamed tiles + f32 intermediates; capped per chip generation. -------
    cd = jnp.dtype(params["compute_dtype"]).itemsize
    xb = jnp.dtype(x.dtype).itemsize
    weights = (Dp * Dp + Dp * NP) * cd + (Dp + NP) * 4
    streams = 2 * (TB * Dp * xb + TB * 2 * 4 + TB * NP * 4)
    interm = 2 * TB * Dp * 4
    est = weights + streams + interm
    cap = _vmem_cap_bytes()
    vmem_limit = int(min(max(2 * est, 32 << 20), max(32 << 20, (3 * cap) // 4)))

    grid = (Bp // TB,)
    out_shape = jax.ShapeDtypeStruct((Bp, NP), jnp.float32)

    def run(single_buffer_weights):
        return pl.pallas_call(
            _proposal_normal_kernel,
            out_shape=out_shape,
            grid_spec=pltpu.PrefetchScalarGridSpec(
                num_scalar_prefetch=0,
                grid=grid,
                in_specs=_build_in_specs(TB, Dp, NP, single_buffer_weights),
                out_specs=pl.BlockSpec((TB, NP), lambda i: (i, 0)),
            ),
            compiler_params=pltpu.CompilerParams(
                dimension_semantics=("parallel",),
                vmem_limit_bytes=vmem_limit,
            ),
        )(xp, w1p, b1p, w2p, b2p, prior)

    try:
        out = jax.block_until_ready(run(True))
    except Exception:
        # Fallback if pl.Buffered(1) single-buffering is rejected by this
        # JAX/Mosaic build; semantics are identical, only VMEM use differs.
        out = run(False)

    return True, out[:B, :2]


def _xavier_uniform(key, shape, gain=1.0):
    # shape is (fan_out, fan_in) in PyTorch Linear convention
    fan_out, fan_in = shape
    bound = gain * math.sqrt(6.0 / (fan_in + fan_out))
    return jax.random.uniform(key, shape, jnp.float32, -bound, bound)


def init_params(key, input_dim):
    k1, k2, k3, k4 = jax.random.split(key, 4)
    relu_gain = math.sqrt(2.0)  # init.calculate_gain('relu')
    # PyTorch stores Linear weight as (out, in); pre-transpose for x @ W.
    w1_pt = _xavier_uniform(k1, (input_dim, input_dim), gain=relu_gain)
    w2_pt = _xavier_uniform(k2, (2, input_dim), gain=1.0)
    # nn.Linear default bias init: U(-1/sqrt(fan_in), 1/sqrt(fan_in))
    bb = 1.0 / math.sqrt(input_dim)
    b1 = jax.random.uniform(k3, (input_dim,), jnp.float32, -bb, bb)
    b2 = jax.random.uniform(k4, (2,), jnp.float32, -bb, bb)
    return w1_pt.T, b1, w2_pt.T, b2


def reference_forward(x, w1, b1, w2, b2, prior_means, prior_stds,
                      compute_dtype=jnp.bfloat16):
    # Mirrors the kernel's dtype handling (bf16 matmul inputs, f32 accumulate
    # and f32 elementwise) for a tight numerical comparison.
    xc = x.astype(compute_dtype)
    h = jnp.dot(xc, w1.astype(compute_dtype),
                preferred_element_type=jnp.float32) + b1
    h = jnp.maximum(h, 0.0)
    y = jnp.dot(h.astype(compute_dtype), w2.astype(compute_dtype),
                preferred_element_type=jnp.float32) + b2
    means = y[:, 0:1]
    stds = jax.nn.softplus(y[:, 1:2])
    pm = prior_means.reshape(-1, 1)
    ps = prior_stds.reshape(-1, 1)
    return jnp.concatenate([means * ps + pm, stds * ps], axis=1)


if __name__ == "__main__":
    B, D = 8, 32
    key = jax.random.PRNGKey(0)
    kx, kp, kparam, ks = jax.random.split(key, 4)

    x = jax.random.normal(kx, (B, D), jnp.float32)
    prior_means = jax.random.normal(kp, (B,), jnp.float32)
    prior_stds = jax.random.uniform(ks, (B,), jnp.float32, 0.5, 2.0)

    w1, b1, w2, b2 = init_params(kparam, D)
    params = prep_params(w1, b1, w2, b2)     # one-time pad + cast (hoisted)

    ok, out = proposal_normal_forward(x, params, prior_means, prior_stds)
    out = jax.block_until_ready(out)

    ref = reference_forward(x, w1, b1, w2, b2, prior_means, prior_stds)
    assert out.shape == (B, 2), out.shape
    assert jnp.allclose(out, ref, atol=1e-3, rtol=1e-3), (out, ref)
    assert ok is True
    print("KERNEL_OK")
</pallas_src>

<mosaic_0001>
module attributes {stable_mosaic.version = 11 : i64} {
  func.func @_proposal_normal_kernel(%arg0: i32, %arg1: memref<16x128xf32, #tpu.memory_space<vmem>>, %arg2: memref<128x128xbf16, #tpu.memory_space<vmem>>, %arg3: memref<1x128xf32, #tpu.memory_space<vmem>>, %arg4: memref<128x8xbf16, #tpu.memory_space<vmem>>, %arg5: memref<1x8xf32, #tpu.memory_space<vmem>>, %arg6: memref<16x2xf32, #tpu.memory_space<vmem>>, %arg7: memref<16x8xf32, #tpu.memory_space<vmem>>) attributes {dimension_semantics = [#tpu.dimension_semantics<parallel>], iteration_bounds = array<i64: 1>, scalar_prefetch = 0 : i64, scratch_operands = 0 : i64, tpu.core_type = #tpu.core_type<tc>, window_params = [{transform_indices = @transform_0, window_bounds = array<i64: 16, 128>}, {pipeline_mode = #tpu.pipeline_mode<synchronous>, transform_indices = @transform_1, window_bounds = array<i64: 128, 128>}, {pipeline_mode = #tpu.pipeline_mode<synchronous>, transform_indices = @transform_2, window_bounds = array<i64: 1, 128>}, {pipeline_mode = #tpu.pipeline_mode<synchronous>, transform_indices = @transform_3, window_bounds = array<i64: 128, 8>}, {pipeline_mode = #tpu.pipeline_mode<synchronous>, transform_indices = @transform_4, window_bounds = array<i64: 1, 8>}, {transform_indices = @transform_5, window_bounds = array<i64: 16, 2>}, {transform_indices = @transform_6, window_bounds = array<i64: 16, 8>}]} {
    %c0 = arith.constant 0 : index
    %c0_0 = arith.constant 0 : index
    %0 = vector.load %arg1[%c0, %c0_0] : memref<16x128xf32, #tpu.memory_space<vmem>>, vector<16x128xf32>
    %1 = arith.truncf %0 : vector<16x128xf32> to vector<16x128xbf16>
    %c0_1 = arith.constant 0 : index
    %c0_2 = arith.constant 0 : index
    %2 = vector.load %arg2[%c0_1, %c0_2] : memref<128x128xbf16, #tpu.memory_space<vmem>>, vector<128x128xbf16>
    %cst = arith.constant dense<0.000000e+00> : vector<16x128xf32>
    %3 = tpu.matmul %1, %2, %cst {dimension_numbers = #tpu.dot_dimension_numbers<[1], [0], [0], [1], [0, 0, 1, 1], [], []>} : vector<16x128xbf16>, vector<128x128xbf16>, vector<16x128xf32> -> vector<16x128xf32>
    %c0_3 = arith.constant 0 : index
    %c0_4 = arith.constant 0 : index
    %4 = vector.load %arg3[%c0_3, %c0_4] : memref<1x128xf32, #tpu.memory_space<vmem>>, vector<1x128xf32>
    %5 = vector.broadcast %4 : vector<1x128xf32> to vector<16x128xf32>
    %6 = arith.addf %3, %5 : vector<16x128xf32>
    %cst_5 = arith.constant 0.000000e+00 : f32
    %7 = vector.broadcast %cst_5 : f32 to vector<16x128xf32>
    %8 = arith.maximumf %6, %7 : vector<16x128xf32>
    %9 = arith.truncf %8 : vector<16x128xf32> to vector<16x128xbf16>
    %c0_6 = arith.constant 0 : index
    %c0_7 = arith.constant 0 : index
    %10 = vector.load %arg4[%c0_6, %c0_7] : memref<128x8xbf16, #tpu.memory_space<vmem>>, vector<128x8xbf16>
    %cst_8 = arith.constant dense<0.000000e+00> : vector<16x8xf32>
    %11 = tpu.matmul %9, %10, %cst_8 {dimension_numbers = #tpu.dot_dimension_numbers<[1], [0], [0], [1], [0, 0, 1, 1], [], []>} : vector<16x128xbf16>, vector<128x8xbf16>, vector<16x8xf32> -> vector<16x8xf32>
    %c0_9 = arith.constant 0 : index
    %c0_10 = arith.constant 0 : index
    %12 = vector.load %arg5[%c0_9, %c0_10] : memref<1x8xf32, #tpu.memory_space<vmem>>, vector<1x8xf32>
    %13 = vector.broadcast %12 : vector<1x8xf32> to vector<16x8xf32>
    %14 = arith.addf %11, %13 : vector<16x8xf32>
    %c0_11 = arith.constant 0 : index
    %c0_12 = arith.constant 0 : index
    %15 = vector.load %arg6[%c0_11, %c0_12] : memref<16x2xf32, #tpu.memory_space<vmem>>, vector<16x2xf32>
    %16 = vector.extract_strided_slice %15 {offsets = [0, 0], sizes = [16, 1], strides = [1, 1]} : vector<16x2xf32> to vector<16x1xf32>
    %17 = vector.extract_strided_slice %15 {offsets = [0, 1], sizes = [16, 1], strides = [1, 1]} : vector<16x2xf32> to vector<16x1xf32>
    %18 = tpu.iota {dimensions = array<i32: 1>} : vector<16x8xi32>
    %cst_13 = arith.constant 0.000000e+00 : f32
    %19 = vector.broadcast %cst_13 : f32 to vector<16x8xf32>
    %20 = arith.maximumf %14, %19 : vector<16x8xf32>
    %21 = math.absf %14 : vector<16x8xf32>
    %cst_14 = arith.constant 0.000000e+00 : f32
    %22 = vector.broadcast %cst_14 : f32 to vector<16x8xf32>
    %23 = arith.subf %22, %21 : vector<16x8xf32>
    %24 = math.exp %23 : vector<16x8xf32>
    %25 = math.log1p %24 : vector<16x8xf32>
    %26 = arith.addf %20, %25 : vector<16x8xf32>
    %c1_i32 = arith.constant 1 : i32
    %27 = vector.broadcast %c1_i32 : i32 to vector<16x8xi32>
    %28 = arith.cmpi eq, %18, %27 : vector<16x8xi32>
    %29 = arith.select %28, %26, %14 : vector<16x8xi1>, vector<16x8xf32>
    %30 = vector.broadcast %17 : vector<16x1xf32> to vector<16x8xf32>
    %31 = arith.mulf %29, %30 : vector<16x8xf32>
    %c0_i32 = arith.constant 0 : i32
    %32 = vector.broadcast %c0_i32 : i32 to vector<16x8xi32>
    %33 = arith.cmpi eq, %18, %32 : vector<16x8xi32>
    %cst_15 = arith.constant 0.000000e+00 : f32
    %34 = vector.shape_cast %16 : vector<16x1xf32> to vector<16x1xf32>
    %35 = vector.broadcast %34 : vector<16x1xf32> to vector<16x8xf32>
    %36 = vector.broadcast %cst_15 : f32 to vector<16x8xf32>
    %37 = arith.select %33, %35, %36 : vector<16x8xi1>, vector<16x8xf32>
    %38 = arith.addf %31, %37 : vector<16x8xf32>
    %c0_16 = arith.constant 0 : index
    %c0_17 = arith.constant 0 : index
    %39 = vector.load %arg7[%c0_16, %c0_17] : memref<16x8xf32, #tpu.memory_space<vmem>>, vector<16x8xf32>
    tpu.vector_store %arg7[%c0_16, %c0_17], %38 {strides = array<i32>} : memref<16x8xf32, #tpu.memory_space<vmem>>, vector<16x8xf32>,
    return
  }
  func.func @transform_0(%arg0: i32) -> (i32, i32) {
    %c0_i32 = arith.constant 0 : i32
    %c0_i32_0 = arith.constant 0 : i32
    return %arg0, %c0_i32 : i32, i32
  }
  func.func @transform_1(%arg0: i32) -> (i32, i32) {
    %c0_i32 = arith.constant 0 : i32
    %c0_i32_0 = arith.constant 0 : i32
    %c0_i32_1 = arith.constant 0 : i32
    return %c0_i32, %c0_i32_0 : i32, i32
  }
  func.func @transform_2(%arg0: i32) -> (i32, i32) {
    %c0_i32 = arith.constant 0 : i32
    %c0_i32_0 = arith.constant 0 : i32
    %c0_i32_1 = arith.constant 0 : i32
    return %c0_i32, %c0_i32_0 : i32, i32
  }
  func.func @transform_3(%arg0: i32) -> (i32, i32) {
    %c0_i32 = arith.constant 0 : i32
    %c0_i32_0 = arith.constant 0 : i32
    %c0_i32_1 = arith.constant 0 : i32
    return %c0_i32, %c0_i32_0 : i32, i32
  }
  func.func @transform_4(%arg0: i32) -> (i32, i32) {
    %c0_i32 = arith.constant 0 : i32
    %c0_i32_0 = arith.constant 0 : i32
    %c0_i32_1 = arith.constant 0 : i32
    return %c0_i32, %c0_i32_0 : i32, i32
  }
  func.func @transform_5(%arg0: i32) -> (i32, i32) {
    %c0_i32 = arith.constant 0 : i32
    %c0_i32_0 = arith.constant 0 : i32
    return %arg0, %c0_i32 : i32, i32
  }
  func.func @transform_6(%arg0: i32) -> (i32, i32) {
    %c0_i32 = arith.constant 0 : i32
    %c0_i32_0 = arith.constant 0 : i32
    return %arg0, %c0_i32 : i32, i32
  }
}

module attributes {stable_mosaic.version = 11 : i64} {
  func.func @_proposal_normal_kernel(%arg0: i32, %arg1: memref<16x128xf32, #tpu.memory_space<vmem>>, %arg2: memref<128x128xbf16, #tpu.memory_space<vmem>>, %arg3: memref<1x128xf32, #tpu.memory_space<vmem>>, %arg4: memref<128x8xbf16, #tpu.memory_space<vmem>>, %arg5: memref<1x8xf32, #tpu.memory_space<vmem>>, %arg6: memref<16x2xf32, #tpu.memory_space<vmem>>, %arg7: memref<16x8xf32, #tpu.memory_space<vmem>>) attributes {dimension_semantics = [#tpu.dimension_semantics<parallel>], iteration_bounds = array<i64: 1>, scalar_prefetch = 0 : i64, scratch_operands = 0 : i64, tpu.core_type = #tpu.core_type<tc>, window_params = [{transform_indices = @transform_0, window_bounds = array<i64: 16, 128>}, {pipeline_mode = #tpu.pipeline_mode<synchronous>, transform_indices = @transform_1, window_bounds = array<i64: 128, 128>}, {pipeline_mode = #tpu.pipeline_mode<synchronous>, transform_indices = @transform_2, window_bounds = array<i64: 1, 128>}, {pipeline_mode = #tpu.pipeline_mode<synchronous>, transform_indices = @transform_3, window_bounds = array<i64: 128, 8>}, {pipeline_mode = #tpu.pipeline_mode<synchronous>, transform_indices = @transform_4, window_bounds = array<i64: 1, 8>}, {transform_indices = @transform_5, window_bounds = array<i64: 16, 2>}, {transform_indices = @transform_6, window_bounds = array<i64: 16, 8>}]} {
    %c0 = arith.constant 0 : index
    %c0_0 = arith.constant 0 : index
    %0 = vector.load %arg1[%c0, %c0_0] : memref<16x128xf32, #tpu.memory_space<vmem>>, vector<16x128xf32>
    %1 = arith.truncf %0 : vector<16x128xf32> to vector<16x128xbf16>
    %c0_1 = arith.constant 0 : index
    %c0_2 = arith.constant 0 : index
    %2 = vector.load %arg2[%c0_1, %c0_2] : memref<128x128xbf16, #tpu.memory_space<vmem>>, vector<128x128xbf16>
    %cst = arith.constant dense<0.000000e+00> : vector<16x128xf32>
    %3 = tpu.matmul %1, %2, %cst {dimension_numbers = #tpu.dot_dimension_numbers<[1], [0], [0], [1], [0, 0, 1, 1], [], []>} : vector<16x128xbf16>, vector<128x128xbf16>, vector<16x128xf32> -> vector<16x128xf32>
    %c0_3 = arith.constant 0 : index
    %c0_4 = arith.constant 0 : index
    %4 = vector.load %arg3[%c0_3, %c0_4] : memref<1x128xf32, #tpu.memory_space<vmem>>, vector<1x128xf32>
    %5 = vector.broadcast %4 : vector<1x128xf32> to vector<16x128xf32>
    %6 = arith.addf %3, %5 : vector<16x128xf32>
    %cst_5 = arith.constant 0.000000e+00 : f32
    %7 = vector.broadcast %cst_5 : f32 to vector<16x128xf32>
    %8 = arith.maximumf %6, %7 : vector<16x128xf32>
    %9 = arith.truncf %8 : vector<16x128xf32> to vector<16x128xbf16>
    %c0_6 = arith.constant 0 : index
    %c0_7 = arith.constant 0 : index
    %10 = vector.load %arg4[%c0_6, %c0_7] : memref<128x8xbf16, #tpu.memory_space<vmem>>, vector<128x8xbf16>
    %cst_8 = arith.constant dense<0.000000e+00> : vector<16x8xf32>
    %11 = tpu.matmul %9, %10, %cst_8 {dimension_numbers = #tpu.dot_dimension_numbers<[1], [0], [0], [1], [0, 0, 1, 1], [], []>} : vector<16x128xbf16>, vector<128x8xbf16>, vector<16x8xf32> -> vector<16x8xf32>
    %c0_9 = arith.constant 0 : index
    %c0_10 = arith.constant 0 : index
    %12 = vector.load %arg5[%c0_9, %c0_10] : memref<1x8xf32, #tpu.memory_space<vmem>>, vector<1x8xf32>
    %13 = vector.broadcast %12 : vector<1x8xf32> to vector<16x8xf32>
    %14 = arith.addf %11, %13 : vector<16x8xf32>
    %c0_11 = arith.constant 0 : index
    %c0_12 = arith.constant 0 : index
    %15 = vector.load %arg6[%c0_11, %c0_12] : memref<16x2xf32, #tpu.memory_space<vmem>>, vector<16x2xf32>
    %16 = vector.extract_strided_slice %15 {offsets = [0, 0], sizes = [16, 1], strides = [1, 1]} : vector<16x2xf32> to vector<16x1xf32>
    %17 = vector.extract_strided_slice %15 {offsets = [0, 1], sizes = [16, 1], strides = [1, 1]} : vector<16x2xf32> to vector<16x1xf32>
    %18 = tpu.iota {dimensions = array<i32: 1>} : vector<16x8xi32>
    %cst_13 = arith.constant 0.000000e+00 : f32
    %19 = vector.broadcast %cst_13 : f32 to vector<16x8xf32>
    %20 = arith.maximumf %14, %19 : vector<16x8xf32>
    %21 = math.absf %14 : vector<16x8xf32>
    %cst_14 = arith.constant 0.000000e+00 : f32
    %22 = vector.broadcast %cst_14 : f32 to vector<16x8xf32>
    %23 = arith.subf %22, %21 : vector<16x8xf32>
    %24 = math.exp %23 : vector<16x8xf32>
    %25 = math.log1p %24 : vector<16x8xf32>
    %26 = arith.addf %20, %25 : vector<16x8xf32>
    %c1_i32 = arith.constant 1 : i32
    %27 = vector.broadcast %c1_i32 : i32 to vector<16x8xi32>
    %28 = arith.cmpi eq, %18, %27 : vector<16x8xi32>
    %29 = arith.select %28, %26, %14 : vector<16x8xi1>, vector<16x8xf32>
    %30 = vector.broadcast %17 : vector<16x1xf32> to vector<16x8xf32>
    %31 = arith.mulf %29, %30 : vector<16x8xf32>
    %c0_i32 = arith.constant 0 : i32
    %32 = vector.broadcast %c0_i32 : i32 to vector<16x8xi32>
    %33 = arith.cmpi eq, %18, %32 : vector<16x8xi32>
    %cst_15 = arith.constant 0.000000e+00 : f32
    %34 = vector.shape_cast %16 : vector<16x1xf32> to vector<16x1xf32>
    %35 = vector.broadcast %34 : vector<16x1xf32> to vector<16x8xf32>
    %36 = vector.broadcast %cst_15 : f32 to vector<16x8xf32>
    %37 = arith.select %33, %35, %36 : vector<16x8xi1>, vector<16x8xf32>
    %38 = arith.addf %31, %37 : vector<16x8xf32>
    %c0_16 = arith.constant 0 : index
    %c0_17 = arith.constant 0 : index
    %39 = vector.load %arg7[%c0_16, %c0_17] : memref<16x8xf32, #tpu.memory_space<vmem>>, vector<16x8xf32>
    tpu.vector_store %arg7[%c0_16, %c0_17], %38 {strides = array<i32>} : memref<16x8xf32, #tpu.memory_space<vmem>>, vector<16x8xf32>,
    return
  }
  func.func @transform_0(%arg0: i32) -> (i32, i32) {
    %c0_i32 = arith.constant 0 : i32
    %c0_i32_0 = arith.constant 0 : i32
    return %arg0, %c0_i32 : i32, i32
  }
  func.func @transform_1(%arg0: i32) -> (i32, i32) {
    %c0_i32 = arith.constant 0 : i32
    %c0_i32_0 = arith.constant 0 : i32
    %c0_i32_1 = arith.constant 0 : i32
    return %c0_i32, %c0_i32_0 : i32, i32
  }
  func.func @transform_2(%arg0: i32) -> (i32, i32) {
    %c0_i32 = arith.constant 0 : i32
    %c0_i32_0 = arith.constant 0 : i32
    %c0_i32_1 = arith.constant 0 : i32
    return %c0_i32, %c0_i32_0 : i32, i32
  }
  func.func @transform_3(%arg0: i32) -> (i32, i32) {
    %c0_i32 = arith.constant 0 : i32
    %c0_i32_0 = arith.constant 0 : i32
    %c0_i32_1 = arith.constant 0 : i32
    return %c0_i32, %c0_i32_0 : i32, i32
  }
  func.func @transform_4(%arg0: i32) -> (i32, i32) {
    %c0_i32 = arith.constant 0 : i32
    %c0_i32_0 = arith.constant 0 : i32
    %c0_i32_1 = arith.constant 0 : i32
    return %c0_i32, %c0_i32_0 : i32, i32
  }
  func.func @transform_5(%arg0: i32) -> (i32, i32) {
    %c0_i32 = arith.constant 0 : i32
    %c0_i32_0 = arith.constant 0 : i32
    return %arg0, %c0_i32 : i32, i32
  }
  func.func @transform_6(%arg0: i32) -> (i32, i32) {
    %c0_i32 = arith.constant 0 : i32
    %c0_i32_0 = arith.constant 0 : i32
    return %arg0, %c0_i32 : i32, i32
  }
}

</mosaic_0001>

<llo_original>
// kernel: tpu_custom_call.1
$region0: #{tpu_custom_call.1}
  #allocation0 [shape = 'u32[]', space=smem, size = 0x4, offset = 0x4, fixed_abs, tag = 'smem constant byte address 0x4 - core index']
  #allocation1 [shape = 'u32[144,128]{1,0:T(1,128)}', space=vmem, size = 0x12000, scoped, tag = 'internal scratch']
  %s0 = inlined_call_operand.vmem [shape: f32[16,128], index: 0, kind: input, shape index: {}]
  %s1 = inlined_call_operand.vmem [shape: bf16[128,128], index: 1, kind: input, shape index: {}]
  %s2 = inlined_call_operand.vmem [shape: f32[1,128], index: 2, kind: input, shape index: {}]
  %s3 = inlined_call_operand.vmem [shape: bf16[128,8], index: 3, kind: input, shape index: {}]
  %s4 = inlined_call_operand.vmem [shape: f32[1,8], index: 4, kind: input, shape index: {}]
  %s5 = inlined_call_operand.vmem [shape: f32[16,2], index: 5, kind: input, shape index: {}]
  %s6 = inlined_call_operand.vmem [shape: f32[16,8], index: 6, kind: output, shape index: {}]
  %s7 = sld [smem:[#allocation0]]
  $region34: #{tpu_custom_call.1} parent=0
    _
  %s9 = ssub.s32 1, %s7
  %s10 = scalar_select 0, %s9, %s7
  // Predicated region
  $region2: #{tpu_custom_call.1} parent=0 // pred_check
    _
  $region3: #{tpu_custom_call.1} parent=0 // pred_check_branch
    %12 = sbr.rel (0) target = $region5
  $region4: #{tpu_custom_call.1} parent=0 // pred_region
    _
  $region5: #{tpu_custom_call.1} parent=0 // pred_fallthru
    _
  // Predicated region
  $region6: #{tpu_custom_call.1} parent=0 // pred_check
    _
  $region7: #{tpu_custom_call.1} parent=0 // pred_check_branch
    %14 = sbr.rel (0) target = $region9
  $region8: #{tpu_custom_call.1} parent=0 // pred_region
    _
  $region9: #{tpu_custom_call.1} parent=0 // pred_fallthru
    _
  // Predicated region
  $region10: #{tpu_custom_call.1} parent=0 // pred_check
    _
  $region11: #{tpu_custom_call.1} parent=0 // pred_check_branch
    %16 = sbr.rel (0) target = $region13
  $region12: #{tpu_custom_call.1} parent=0 // pred_region
    _
  $region13: #{tpu_custom_call.1} parent=0 // pred_fallthru
    _
  // Predicated region
  $region14: #{tpu_custom_call.1} parent=0 // pred_check
    _
  $region15: #{tpu_custom_call.1} parent=0 // pred_check_branch
    %18 = sbr.rel (0) target = $region17
  $region16: #{tpu_custom_call.1} parent=0 // pred_region
    _
  $region17: #{tpu_custom_call.1} parent=0 // pred_fallthru
    _
  // Predicated region
  $region18: #{tpu_custom_call.1} parent=0 // pred_check
    _
  $region19: #{tpu_custom_call.1} parent=0 // pred_check_branch
    %20 = sbr.rel (0) target = $region21
  $region20: #{tpu_custom_call.1} parent=0 // pred_region
    _
  $region21: #{tpu_custom_call.1} parent=0 // pred_fallthru
    _
  // Predicated region
  $region22: #{tpu_custom_call.1} parent=0 // pred_check
    _
  $region23: #{tpu_custom_call.1} parent=0 // pred_check_branch
    %22 = sbr.rel (0) target = $region25
  $region24: #{tpu_custom_call.1} parent=0 // pred_region
    _
  $region25: #{tpu_custom_call.1} parent=0 // pred_fallthru
    _
  %v24 = vld [vmem:[%s0] sm:$0xff]
  %v25 = vld [vmem:[%s0 + $0x8] sm:$0xff]
  %v26 = vpack.c.bf16 %v25, %v24
  %v27 = vld [vmem:[%s1] sm:$0xf]
  %v28 = vld [vmem:[%s1 + $0x4] sm:$0xf]
  %v29 = vld [vmem:[%s1 + $0x8] sm:$0xf]
  %v30 = vld [vmem:[%s1 + $0xc] sm:$0xf]
  %v31 = vld [vmem:[%s1 + $0x10] sm:$0xf]
  %v32 = vld [vmem:[%s1 + $0x14] sm:$0xf]
  %v33 = vld [vmem:[%s1 + $0x18] sm:$0xf]
  %v34 = vld [vmem:[%s1 + $0x1c] sm:$0xf]
  %v35 = vld [vmem:[%s1 + $0x20] sm:$0xf]
  %v36 = vld [vmem:[%s1 + $0x24] sm:$0xf]
  %v37 = vld [vmem:[%s1 + $0x28] sm:$0xf]
  %v38 = vld [vmem:[%s1 + $0x2c] sm:$0xf]
  %v39 = vld [vmem:[%s1 + $0x30] sm:$0xf]
  %v40 = vld [vmem:[%s1 + $0x34] sm:$0xf]
  %v41 = vld [vmem:[%s1 + $0x38] sm:$0xf]
  %v42 = vld [vmem:[%s1 + $0x3c] sm:$0xf]
  %v43 = vld [vmem:[%s2] sm:$0x1]
  %v45 = vlaneseq
  %v46 = vshrl.u32 %v45, 7
  %v47 = vsub.s32 0, %v46
  %v48 = vrot.slane %v43, %v47
  %v66 = vunpack.c.l.b16 %v27
  %v67 = vunpack.c.l.b16 %v28
  %v68 = vunpack.c.l.b16 %v29
  %v69 = vunpack.c.l.b16 %v30
  %v70 = vunpack.c.l.b16 %v31
  %v71 = vunpack.c.l.b16 %v32
  %v72 = vunpack.c.l.b16 %v33
  %v73 = vunpack.c.l.b16 %v34
  %v74 = vunpack.c.l.b16 %v35
  %v75 = vunpack.c.l.b16 %v36
  %v76 = vunpack.c.l.b16 %v37
  %v77 = vunpack.c.l.b16 %v38
  %v78 = vunpack.c.l.b16 %v39
  %v79 = vunpack.c.l.b16 %v40
  %v80 = vunpack.c.l.b16 %v41
  %v81 = vunpack.c.l.b16 %v42
  %v82 = vpack.c.b16 %v67, %v66
  %v83 = vpack.c.b16 %v69, %v68
  %v84 = vpack.c.b16 %v71, %v70
  %v85 = vpack.c.b16 %v73, %v72
  %v86 = vpack.c.b16 %v75, %v74
  %v87 = vpack.c.b16 %v77, %v76
  %v88 = vpack.c.b16 %v79, %v78
  %v89 = vpack.c.b16 %v81, %v80
  %98 = vmatprep.subr.bf16.mxu0 0
  %99 = vmatpush1.bf16.msra.mxu0 %v82
  %100 = vmatprep.subr.bf16.mxu0 0
  %101 = vmatpush1.bf16.msra.mxu0 %v83
  %102 = vmatprep.subr.bf16.mxu0 0
  %103 = vmatpush1.bf16.msra.mxu0 %v84
  %104 = vmatprep.subr.bf16.mxu0 0
  %105 = vmatpush1.bf16.msra.mxu0 %v85
  %106 = vmatprep.subr.bf16.mxu0 0
  %107 = vmatpush1.bf16.msra.mxu0 %v86
  %108 = vmatprep.subr.bf16.mxu0 0
  %109 = vmatpush1.bf16.msra.mxu0 %v87
  %110 = vmatprep.subr.bf16.mxu0 0
  %111 = vmatpush1.bf16.msra.mxu0 %v88
  %112 = vmatprep.subr.bf16.mxu0 0
  %113 = vmatpush1.bf16.msra.mxu0 %v89
  %114 = vmatprep.subr.bf16.mxu0 0
  %115 = vmatpush1.bf16.msra.mxu0 0
  %116 = vmatprep.subr.bf16.mxu0 0
  %117 = vmatpush1.bf16.msra.mxu0 0
  %118 = vmatprep.subr.bf16.mxu0 0
  %119 = vmatpush1.bf16.msra.mxu0 0
  %120 = vmatprep.subr.bf16.mxu0 0
  %121 = vmatpush1.bf16.msra.mxu0 0
  %122 = vmatprep.subr.bf16.mxu0 0
  %123 = vmatpush1.bf16.msra.mxu0 0
  %124 = vmatprep.subr.bf16.mxu0 0
  %125 = vmatpush1.bf16.msra.mxu0 0
  %126 = vmatprep.subr.bf16.mxu0 0
  %127 = vmatpush1.bf16.msra.mxu0 0
  %128 = vmatprep.subr.bf16.mxu0 0
  %129 = vmatpush1.bf16.msra.mxu0 0
  %130 = vmatprep.mubr.bf16.mxu0 0
  %131 = vmatmul.mubr.bf16.gmra.mrb[0].mxu0 %v26
  %v132 = vpop.f32.mrb[0].mxu0
  %v133 = vadd.f32 %v48, %v132
  %v134 = vpop.f32.mrb[0].mxu0
  %v135 = vpop.f32.mrb[0].mxu0
  %v136 = vadd.f32 %v48, %v135
  %v137 = vpop.f32.mrb[0].mxu0
  %138 = vdwg.mxu0
  %v139 = vmax.f32 %v133, 0.0
  %v140 = vmax.f32 %v136, 0.0
  %v141 = vpack.c.bf16 %v140, %v139
  %v142 = vld [vmem:[%s3] sm:$0xf]
  %v143 = vld [vmem:[%s3 + $0x4] sm:$0xf]
  %v144 = vld [vmem:[%s3 + $0x8] sm:$0xf]
  %v145 = vld [vmem:[%s3 + $0xc] sm:$0xf]
  %v146 = vld [vmem:[%s3 + $0x10] sm:$0xf]
  %v147 = vld [vmem:[%s3 + $0x14] sm:$0xf]
  %v148 = vld [vmem:[%s3 + $0x18] sm:$0xf]
  %v149 = vld [vmem:[%s3 + $0x1c] sm:$0xf]
  %v150 = vld [vmem:[%s3 + $0x20] sm:$0xf]
  %v151 = vld [vmem:[%s3 + $0x24] sm:$0xf]
  %v152 = vld [vmem:[%s3 + $0x28] sm:$0xf]
  %v153 = vld [vmem:[%s3 + $0x2c] sm:$0xf]
  %v154 = vld [vmem:[%s3 + $0x30] sm:$0xf]
  %v155 = vld [vmem:[%s3 + $0x34] sm:$0xf]
  %v156 = vld [vmem:[%s3 + $0x38] sm:$0xf]
  %v157 = vld [vmem:[%s3 + $0x3c] sm:$0xf]
  %v158 = vld [vmem:[%s4] sm:$0x1]
  %v160 = vlaneseq
  %v161 = vshrl.u32 %v160, 7
  %v162 = vsub.s32 0, %v161
  %v163 = vrot.slane %v158, %v162
  %v181 = vunpack.c.l.b16 %v142
  %v182 = vunpack.c.l.b16 %v143
  %v183 = vunpack.c.l.b16 %v144
  %v184 = vunpack.c.l.b16 %v145
  %v185 = vunpack.c.l.b16 %v146
  %v186 = vunpack.c.l.b16 %v147
  %v187 = vunpack.c.l.b16 %v148
  %v188 = vunpack.c.l.b16 %v149
  %v189 = vunpack.c.l.b16 %v150
  %v190 = vunpack.c.l.b16 %v151
  %v191 = vunpack.c.l.b16 %v152
  %v192 = vunpack.c.l.b16 %v153
  %v193 = vunpack.c.l.b16 %v154
  %v194 = vunpack.c.l.b16 %v155
  %v195 = vunpack.c.l.b16 %v156
  %v196 = vunpack.c.l.b16 %v157
  %v197 = vpack.c.b16 %v182, %v181
  %v198 = vpack.c.b16 %v184, %v183
  %v199 = vpack.c.b16 %v186, %v185
  %v200 = vpack.c.b16 %v188, %v187
  %v201 = vpack.c.b16 %v190, %v189
  %v202 = vpack.c.b16 %v192, %v191
  %v203 = vpack.c.b16 %v194, %v193
  %v204 = vpack.c.b16 %v196, %v195
  %213 = vmatprep.subr.bf16.mxu0 0
  %214 = vmatpush1.bf16.msra.mxu0 %v197
  %215 = vmatprep.subr.bf16.mxu0 0
  %216 = vmatpush1.bf16.msra.mxu0 %v198
  %217 = vmatprep.subr.bf16.mxu0 0
  %218 = vmatpush1.bf16.msra.mxu0 %v199
  %219 = vmatprep.subr.bf16.mxu0 0
  %220 = vmatpush1.bf16.msra.mxu0 %v200
  %221 = vmatprep.subr.bf16.mxu0 0
  %222 = vmatpush1.bf16.msra.mxu0 %v201
  %223 = vmatprep.subr.bf16.mxu0 0
  %224 = vmatpush1.bf16.msra.mxu0 %v202
  %225 = vmatprep.subr.bf16.mxu0 0
  %226 = vmatpush1.bf16.msra.mxu0 %v203
  %227 = vmatprep.subr.bf16.mxu0 0
  %228 = vmatpush1.bf16.msra.mxu0 %v204
  %229 = vmatprep.subr.bf16.mxu0 0
  %230 = vmatpush1.bf16.msra.mxu0 0
  %231 = vmatprep.subr.bf16.mxu0 0
  %232 = vmatpush1.bf16.msra.mxu0 0
  %233 = vmatprep.subr.bf16.mxu0 0
  %234 = vmatpush1.bf16.msra.mxu0 0
  %235 = vmatprep.subr.bf16.mxu0 0
  %236 = vmatpush1.bf16.msra.mxu0 0
  %237 = vmatprep.subr.bf16.mxu0 0
  %238 = vmatpush1.bf16.msra.mxu0 0
  %239 = vmatprep.subr.bf16.mxu0 0
  %240 = vmatpush1.bf16.msra.mxu0 0
  %241 = vmatprep.subr.bf16.mxu0 0
  %242 = vmatpush1.bf16.msra.mxu0 0
  %243 = vmatprep.subr.bf16.mxu0 0
  %244 = vmatpush1.bf16.msra.mxu0 0
  %245 = vmatprep.mubr.bf16.mxu0 0
  %246 = vmatmul.mubr.bf16.gmra.mrb[0].mxu0 %v141
  %v247 = vpop.f32.mrb[0].mxu0
  %v248 = vadd.f32 %v163, %v247
  %v249 = vpop.f32.mrb[0].mxu0
  %v250 = vpop.f32.mrb[0].mxu0
  %v251 = vadd.f32 %v163, %v250
  %v252 = vpop.f32.mrb[0].mxu0
  %253 = vdwg.mxu0
  %v254 = vld [vmem:[%s5] sm:$0xff]
  %v255 = vld [vmem:[%s5 + $0x8] sm:$0xff]
  %v256 = vlaneseq
  %v257 = vand.u32 %v256, 127
  %v258 = vmax.f32 %v248, 0.0
  %v259 = vmax.f32 %v251, 0.0
  %v260 = vand.u32 2147483647, %v248
  %v261 = vand.u32 2147483647, %v251
  %v262 = vsub.f32 0.0, %v260
  %v263 = vsub.f32 0.0, %v261
  %v264 = vmul.f32 %v262, 1.442695
  %v265 = vpow.pop %v264
  %v266 = vmul.f32 %v263, 1.442695
  %v267 = vpow.pop %v266
  %v268 = vadd.f32 %v265, 1.0
  %v269 = vlog2.pop %v268
  %v270 = vmul.f32 %v269, 0.6931472
  %v271 = vmul.f32 -0.5, %v265
  %v272 = vadd.f32 %v271, 1.0
  %v273 = vmul.f32 %v272, %v265
  %v274 = vand.u32 2147483647, %v265
  %vm275 = vcmp.lt.f32.partialorder %v274, 0.0004427343
  %v276 = vsel %vm275, %v273, %v270
  %v277 = vadd.f32 %v267, 1.0
  %v278 = vlog2.pop %v277
  %v279 = vmul.f32 %v278, 0.6931472
  %v280 = vmul.f32 -0.5, %v267
  %v281 = vadd.f32 %v280, 1.0
  %v282 = vmul.f32 %v281, %v267
  %v283 = vand.u32 2147483647, %v267
  %vm284 = vcmp.lt.f32.partialorder %v283, 0.0004427343
  %v285 = vsel %vm284, %v282, %v279
  %v286 = vadd.f32 %v258, %v276
  %v287 = vadd.f32 %v259, %v285
  %vm288 = vcmp.eq.s32.totalorder %v257, 1
  %v289 = vsel %vm288, %v286, %v248
  %v290 = vsel %vm288, %v287, %v251
  %292 = vset.pattern.permute.xlu0 1
  %293 = vperm.xlu0 %292, %v254
  %v294 = vpop.permute.xlu0 %293
  %297 = vset.pattern.permute.xlu0 1
  %298 = vperm.xlu0 %297, %v255
  %v299 = vpop.permute.xlu0 %298
  %v301 = vmul.f32 %v289, %v294
  %v302 = vmul.f32 %v290, %v299
  %vm303 = vcmp.eq.s32.totalorder %v257, 0
  %304 = vset.pattern.permute.xlu0 0
  %305 = vperm.xlu0 %304, %v254
  %v306 = vpop.permute.xlu0 %305
  %308 = vset.pattern.permute.xlu0 0
  %309 = vperm.xlu0 %308, %v255
  %v310 = vpop.permute.xlu0 %309
  %v312 = vsel %vm303, %v306, 0.0
  %v313 = vsel %vm303, %v310, 0.0
  %v314 = vadd.f32 %v301, %v312
  %v315 = vadd.f32 %v302, %v313
  %vm316 = vcmask 64512
  %317 = vst.msk [vmem:[%s6] sm:$0xff] %vm316, %v314
  %318 = vst.msk [vmem:[%s6 + $0x8] sm:$0xff] %vm316, %v315
  // Predicated region
  $region26: #{tpu_custom_call.1} parent=0 // pred_check
    _
  $region27: #{tpu_custom_call.1} parent=0 // pred_check_branch
    %320 = sbr.rel (0) target = $region29
  $region28: #{tpu_custom_call.1} parent=0 // pred_region
    _
  $region29: #{tpu_custom_call.1} parent=0 // pred_fallthru
    _
  // Predicated region
  $region30: #{tpu_custom_call.1} parent=0 // pred_check
    _
  $region31: #{tpu_custom_call.1} parent=0 // pred_check_branch
    %322 = sbr.rel (0) target = $region33
  $region32: #{tpu_custom_call.1} parent=0 // pred_region
    _
  $region33: #{tpu_custom_call.1} parent=0 // pred_fallthru
    _

// kernel: tpu_custom_call.1
$region0: #{tpu_custom_call.1}
  #allocation0 [shape = 'u32[]', space=smem, size = 0x4, offset = 0x4, fixed_abs, tag = 'smem constant byte address 0x4 - core index']
  #allocation1 [shape = 'u32[144,128]{1,0:T(1,128)}', space=vmem, size = 0x12000, scoped, tag = 'internal scratch']
  %s0 = inlined_call_operand.vmem [shape: f32[16,128], index: 0, kind: input, shape index: {}]
  %s1 = inlined_call_operand.vmem [shape: bf16[128,128], index: 1, kind: input, shape index: {}]
  %s2 = inlined_call_operand.vmem [shape: f32[1,128], index: 2, kind: input, shape index: {}]
  %s3 = inlined_call_operand.vmem [shape: bf16[128,8], index: 3, kind: input, shape index: {}]
  %s4 = inlined_call_operand.vmem [shape: f32[1,8], index: 4, kind: input, shape index: {}]
  %s5 = inlined_call_operand.vmem [shape: f32[16,2], index: 5, kind: input, shape index: {}]
  %s6 = inlined_call_operand.vmem [shape: f32[16,8], index: 6, kind: output, shape index: {}]
  %s7 = sld [smem:[#allocation0]]
  $region34: #{tpu_custom_call.1} parent=0
    _
  %s9 = ssub.s32 1, %s7
  %s10 = scalar_select 0, %s9, %s7
  // Predicated region
  $region2: #{tpu_custom_call.1} parent=0 // pred_check
    _
  $region3: #{tpu_custom_call.1} parent=0 // pred_check_branch
    %12 = sbr.rel (0) target = $region5
  $region4: #{tpu_custom_call.1} parent=0 // pred_region
    _
  $region5: #{tpu_custom_call.1} parent=0 // pred_fallthru
    _
  // Predicated region
  $region6: #{tpu_custom_call.1} parent=0 // pred_check
    _
  $region7: #{tpu_custom_call.1} parent=0 // pred_check_branch
    %14 = sbr.rel (0) target = $region9
  $region8: #{tpu_custom_call.1} parent=0 // pred_region
    _
  $region9: #{tpu_custom_call.1} parent=0 // pred_fallthru
    _
  // Predicated region
  $region10: #{tpu_custom_call.1} parent=0 // pred_check
    _
  $region11: #{tpu_custom_call.1} parent=0 // pred_check_branch
    %16 = sbr.rel (0) target = $region13
  $region12: #{tpu_custom_call.1} parent=0 // pred_region
    _
  $region13: #{tpu_custom_call.1} parent=0 // pred_fallthru
    _
  // Predicated region
  $region14: #{tpu_custom_call.1} parent=0 // pred_check
    _
  $region15: #{tpu_custom_call.1} parent=0 // pred_check_branch
    %18 = sbr.rel (0) target = $region17
  $region16: #{tpu_custom_call.1} parent=0 // pred_region
    _
  $region17: #{tpu_custom_call.1} parent=0 // pred_fallthru
    _
  // Predicated region
  $region18: #{tpu_custom_call.1} parent=0 // pred_check
    _
  $region19: #{tpu_custom_call.1} parent=0 // pred_check_branch
    %20 = sbr.rel (0) target = $region21
  $region20: #{tpu_custom_call.1} parent=0 // pred_region
    _
  $region21: #{tpu_custom_call.1} parent=0 // pred_fallthru
    _
  // Predicated region
  $region22: #{tpu_custom_call.1} parent=0 // pred_check
    _
  $region23: #{tpu_custom_call.1} parent=0 // pred_check_branch
    %22 = sbr.rel (0) target = $region25
  $region24: #{tpu_custom_call.1} parent=0 // pred_region
    _
  $region25: #{tpu_custom_call.1} parent=0 // pred_fallthru
    _
  %v24 = vld [vmem:[%s0] sm:$0xff]
  %v25 = vld [vmem:[%s0 + $0x8] sm:$0xff]
  %v26 = vpack.c.bf16 %v25, %v24
  %v27 = vld [vmem:[%s1] sm:$0xf]
  %v28 = vld [vmem:[%s1 + $0x4] sm:$0xf]
  %v29 = vld [vmem:[%s1 + $0x8] sm:$0xf]
  %v30 = vld [vmem:[%s1 + $0xc] sm:$0xf]
  %v31 = vld [vmem:[%s1 + $0x10] sm:$0xf]
  %v32 = vld [vmem:[%s1 + $0x14] sm:$0xf]
  %v33 = vld [vmem:[%s1 + $0x18] sm:$0xf]
  %v34 = vld [vmem:[%s1 + $0x1c] sm:$0xf]
  %v35 = vld [vmem:[%s1 + $0x20] sm:$0xf]
  %v36 = vld [vmem:[%s1 + $0x24] sm:$0xf]
  %v37 = vld [vmem:[%s1 + $0x28] sm:$0xf]
  %v38 = vld [vmem:[%s1 + $0x2c] sm:$0xf]
  %v39 = vld [vmem:[%s1 + $0x30] sm:$0xf]
  %v40 = vld [vmem:[%s1 + $0x34] sm:$0xf]
  %v41 = vld [vmem:[%s1 + $0x38] sm:$0xf]
  %v42 = vld [vmem:[%s1 + $0x3c] sm:$0xf]
  %v43 = vld [vmem:[%s2] sm:$0x1]
  %v45 = vlaneseq
  %v46 = vshrl.u32 %v45, 7
  %v47 = vsub.s32 0, %v46
  %v48 = vrot.slane %v43, %v47
  %v66 = vunpack.c.l.b16 %v27
  %v67 = vunpack.c.l.b16 %v28
  %v68 = vunpack.c.l.b16 %v29
  %v69 = vunpack.c.l.b16 %v30
  %v70 = vunpack.c.l.b16 %v31
  %v71 = vunpack.c.l.b16 %v32
  %v72 = vunpack.c.l.b16 %v33
  %v73 = vunpack.c.l.b16 %v34
  %v74 = vunpack.c.l.b16 %v35
  %v75 = vunpack.c.l.b16 %v36
  %v76 = vunpack.c.l.b16 %v37
  %v77 = vunpack.c.l.b16 %v38
  %v78 = vunpack.c.l.b16 %v39
  %v79 = vunpack.c.l.b16 %v40
  %v80 = vunpack.c.l.b16 %v41
  %v81 = vunpack.c.l.b16 %v42
  %v82 = vpack.c.b16 %v67, %v66
  %v83 = vpack.c.b16 %v69, %v68
  %v84 = vpack.c.b16 %v71, %v70
  %v85 = vpack.c.b16 %v73, %v72
  %v86 = vpack.c.b16 %v75, %v74
  %v87 = vpack.c.b16 %v77, %v76
  %v88 = vpack.c.b16 %v79, %v78
  %v89 = vpack.c.b16 %v81, %v80
  %98 = vmatprep.subr.bf16.mxu0 0
  %99 = vmatpush1.bf16.msra.mxu0 %v82
  %100 = vmatprep.subr.bf16.mxu0 0
  %101 = vmatpush1.bf16.msra.mxu0 %v83
  %102 = vmatprep.subr.bf16.mxu0 0
  %103 = vmatpush1.bf16.msra.mxu0 %v84
  %104 = vmatprep.subr.bf16.mxu0 0
  %105 = vmatpush1.bf16.msra.mxu0 %v85
  %106 = vmatprep.subr.bf16.mxu0 0
  %107 = vmatpush1.bf16.msra.mxu0 %v86
  %108 = vmatprep.subr.bf16.mxu0 0
  %109 = vmatpush1.bf16.msra.mxu0 %v87
  %110 = vmatprep.subr.bf16.mxu0 0
  %111 = vmatpush1.bf16.msra.mxu0 %v88
  %112 = vmatprep.subr.bf16.mxu0 0
  %113 = vmatpush1.bf16.msra.mxu0 %v89
  %114 = vmatprep.subr.bf16.mxu0 0
  %115 = vmatpush1.bf16.msra.mxu0 0
  %116 = vmatprep.subr.bf16.mxu0 0
  %117 = vmatpush1.bf16.msra.mxu0 0
  %118 = vmatprep.subr.bf16.mxu0 0
  %119 = vmatpush1.bf16.msra.mxu0 0
  %120 = vmatprep.subr.bf16.mxu0 0
  %121 = vmatpush1.bf16.msra.mxu0 0
  %122 = vmatprep.subr.bf16.mxu0 0
  %123 = vmatpush1.bf16.msra.mxu0 0
  %124 = vmatprep.subr.bf16.mxu0 0
  %125 = vmatpush1.bf16.msra.mxu0 0
  %126 = vmatprep.subr.bf16.mxu0 0
  %127 = vmatpush1.bf16.msra.mxu0 0
  %128 = vmatprep.subr.bf16.mxu0 0
  %129 = vmatpush1.bf16.msra.mxu0 0
  %130 = vmatprep.mubr.bf16.mxu0 0
  %131 = vmatmul.mubr.bf16.gmra.mrb[0].mxu0 %v26
  %v132 = vpop.f32.mrb[0].mxu0
  %v133 = vadd.f32 %v48, %v132
  %v134 = vpop.f32.mrb[0].mxu0
  %v135 = vpop.f32.mrb[0].mxu0
  %v136 = vadd.f32 %v48, %v135
  %v137 = vpop.f32.mrb[0].mxu0
  %138 = vdwg.mxu0
  %v139 = vmax.f32 %v133, 0.0
  %v140 = vmax.f32 %v136, 0.0
  %v141 = vpack.c.bf16 %v140, %v139
  %v142 = vld [vmem:[%s3] sm:$0xf]
  %v143 = vld [vmem:[%s3 + $0x4] sm:$0xf]
  %v144 = vld [vmem:[%s3 + $0x8] sm:$0xf]
  %v145 = vld [vmem:[%s3 + $0xc] sm:$0xf]
  %v146 = vld [vmem:[%s3 + $0x10] sm:$0xf]
  %v147 = vld [vmem:[%s3 + $0x14] sm:$0xf]
  %v148 = vld [vmem:[%s3 + $0x18] sm:$0xf]
  %v149 = vld [vmem:[%s3 + $0x1c] sm:$0xf]
  %v150 = vld [vmem:[%s3 + $0x20] sm:$0xf]
  %v151 = vld [vmem:[%s3 + $0x24] sm:$0xf]
  %v152 = vld [vmem:[%s3 + $0x28] sm:$0xf]
  %v153 = vld [vmem:[%s3 + $0x2c] sm:$0xf]
  %v154 = vld [vmem:[%s3 + $0x30] sm:$0xf]
  %v155 = vld [vmem:[%s3 + $0x34] sm:$0xf]
  %v156 = vld [vmem:[%s3 + $0x38] sm:$0xf]
  %v157 = vld [vmem:[%s3 + $0x3c] sm:$0xf]
  %v158 = vld [vmem:[%s4] sm:$0x1]
  %v160 = vlaneseq
  %v161 = vshrl.u32 %v160, 7
  %v162 = vsub.s32 0, %v161
  %v163 = vrot.slane %v158, %v162
  %v181 = vunpack.c.l.b16 %v142
  %v182 = vunpack.c.l.b16 %v143
  %v183 = vunpack.c.l.b16 %v144
  %v184 = vunpack.c.l.b16 %v145
  %v185 = vunpack.c.l.b16 %v146
  %v186 = vunpack.c.l.b16 %v147
  %v187 = vunpack.c.l.b16 %v148
  %v188 = vunpack.c.l.b16 %v149
  %v189 = vunpack.c.l.b16 %v150
  %v190 = vunpack.c.l.b16 %v151
  %v191 = vunpack.c.l.b16 %v152
  %v192 = vunpack.c.l.b16 %v153
  %v193 = vunpack.c.l.b16 %v154
  %v194 = vunpack.c.l.b16 %v155
  %v195 = vunpack.c.l.b16 %v156
  %v196 = vunpack.c.l.b16 %v157
  %v197 = vpack.c.b16 %v182, %v181
  %v198 = vpack.c.b16 %v184, %v183
  %v199 = vpack.c.b16 %v186, %v185
  %v200 = vpack.c.b16 %v188, %v187
  %v201 = vpack.c.b16 %v190, %v189
  %v202 = vpack.c.b16 %v192, %v191
  %v203 = vpack.c.b16 %v194, %v193
  %v204 = vpack.c.b16 %v196, %v195
  %213 = vmatprep.subr.bf16.mxu0 0
  %214 = vmatpush1.bf16.msra.mxu0 %v197
  %215 = vmatprep.subr.bf16.mxu0 0
  %216 = vmatpush1.bf16.msra.mxu0 %v198
  %217 = vmatprep.subr.bf16.mxu0 0
  %218 = vmatpush1.bf16.msra.mxu0 %v199
  %219 = vmatprep.subr.bf16.mxu0 0
  %220 = vmatpush1.bf16.msra.mxu0 %v200
  %221 = vmatprep.subr.bf16.mxu0 0
  %222 = vmatpush1.bf16.msra.mxu0 %v201
  %223 = vmatprep.subr.bf16.mxu0 0
  %224 = vmatpush1.bf16.msra.mxu0 %v202
  %225 = vmatprep.subr.bf16.mxu0 0
  %226 = vmatpush1.bf16.msra.mxu0 %v203
  %227 = vmatprep.subr.bf16.mxu0 0
  %228 = vmatpush1.bf16.msra.mxu0 %v204
  %229 = vmatprep.subr.bf16.mxu0 0
  %230 = vmatpush1.bf16.msra.mxu0 0
  %231 = vmatprep.subr.bf16.mxu0 0
  %232 = vmatpush1.bf16.msra.mxu0 0
  %233 = vmatprep.subr.bf16.mxu0 0
  %234 = vmatpush1.bf16.msra.mxu0 0
  %235 = vmatprep.subr.bf16.mxu0 0
  %236 = vmatpush1.bf16.msra.mxu0 0
  %237 = vmatprep.subr.bf16.mxu0 0
  %238 = vmatpush1.bf16.msra.mxu0 0
  %239 = vmatprep.subr.bf16.mxu0 0
  %240 = vmatpush1.bf16.msra.mxu0 0
  %241 = vmatprep.subr.bf16.mxu0 0
  %242 = vmatpush1.bf16.msra.mxu0 0
  %243 = vmatprep.subr.bf16.mxu0 0
  %244 = vmatpush1.bf16.msra.mxu0 0
  %245 = vmatprep.mubr.bf16.mxu0 0
  %246 = vmatmul.mubr.bf16.gmra.mrb[0].mxu0 %v141
  %v247 = vpop.f32.mrb[0].mxu0
  %v248 = vadd.f32 %v163, %v247
  %v249 = vpop.f32.mrb[0].mxu0
  %v250 = vpop.f32.mrb[0].mxu0
  %v251 = vadd.f32 %v163, %v250
  %v252 = vpop.f32.mrb[0].mxu0
  %253 = vdwg.mxu0
  %v254 = vld [vmem:[%s5] sm:$0xff]
  %v255 = vld [vmem:[%s5 + $0x8] sm:$0xff]
  %v256 = vlaneseq
  %v257 = vand.u32 %v256, 127
  %v258 = vmax.f32 %v248, 0.0
  %v259 = vmax.f32 %v251, 0.0
  %v260 = vand.u32 2147483647, %v248
  %v261 = vand.u32 2147483647, %v251
  %v262 = vsub.f32 0.0, %v260
  %v263 = vsub.f32 0.0, %v261
  %v264 = vmul.f32 %v262, 1.442695
  %v265 = vpow.pop %v264
  %v266 = vmul.f32 %v263, 1.442695
  %v267 = vpow.pop %v266
  %v268 = vadd.f32 %v265, 1.0
  %v269 = vlog2.pop %v268
  %v270 = vmul.f32 %v269, 0.6931472
  %v271 = vmul.f32 -0.5, %v265
  %v272 = vadd.f32 %v271, 1.0
  %v273 = vmul.f32 %v272, %v265
  %v274 = vand.u32 2147483647, %v265
  %vm275 = vcmp.lt.f32.partialorder %v274, 0.0004427343
  %v276 = vsel %vm275, %v273, %v270
  %v277 = vadd.f32 %v267, 1.0
  %v278 = vlog2.pop %v277
  %v279 = vmul.f32 %v278, 0.6931472
  %v280 = vmul.f32 -0.5, %v267
  %v281 = vadd.f32 %v280, 1.0
  %v282 = vmul.f32 %v281, %v267
  %v283 = vand.u32 2147483647, %v267
  %vm284 = vcmp.lt.f32.partialorder %v283, 0.0004427343
  %v285 = vsel %vm284, %v282, %v279
  %v286 = vadd.f32 %v258, %v276
  %v287 = vadd.f32 %v259, %v285
  %vm288 = vcmp.eq.s32.totalorder %v257, 1
  %v289 = vsel %vm288, %v286, %v248
  %v290 = vsel %vm288, %v287, %v251
  %292 = vset.pattern.permute.xlu0 1
  %293 = vperm.xlu0 %292, %v254
  %v294 = vpop.permute.xlu0 %293
  %297 = vset.pattern.permute.xlu0 1
  %298 = vperm.xlu0 %297, %v255
  %v299 = vpop.permute.xlu0 %298
  %v301 = vmul.f32 %v289, %v294
  %v302 = vmul.f32 %v290, %v299
  %vm303 = vcmp.eq.s32.totalorder %v257, 0
  %304 = vset.pattern.permute.xlu0 0
  %305 = vperm.xlu0 %304, %v254
  %v306 = vpop.permute.xlu0 %305
  %308 = vset.pattern.permute.xlu0 0
  %309 = vperm.xlu0 %308, %v255
  %v310 = vpop.permute.xlu0 %309
  %v312 = vsel %vm303, %v306, 0.0
  %v313 = vsel %vm303, %v310, 0.0
  %v314 = vadd.f32 %v301, %v312
  %v315 = vadd.f32 %v302, %v313
  %vm316 = vcmask 64512
  %317 = vst.msk [vmem:[%s6] sm:$0xff] %vm316, %v314
  %318 = vst.msk [vmem:[%s6 + $0x8] sm:$0xff] %vm316, %v315
  // Predicated region
  $region26: #{tpu_custom_call.1} parent=0 // pred_check
    _
  $region27: #{tpu_custom_call.1} parent=0 // pred_check_branch
    %320 = sbr.rel (0) target = $region29
  $region28: #{tpu_custom_call.1} parent=0 // pred_region
    _
  $region29: #{tpu_custom_call.1} parent=0 // pred_fallthru
    _
  // Predicated region
  $region30: #{tpu_custom_call.1} parent=0 // pred_check
    _
  $region31: #{tpu_custom_call.1} parent=0 // pred_check_branch
    %322 = sbr.rel (0) target = $region33
  $region32: #{tpu_custom_call.1} parent=0 // pred_region
    _
  $region33: #{tpu_custom_call.1} parent=0 // pred_fallthru
    _

</llo_original>
